<compile_context>
chip_gen: v7x
topology: tpu7x:2x2x1
jax: 0.10.0
libtpu: 0.0.40
codegen_flags: <defaults>
</compile_context>

<pallas_src>
import functools

import jax
import jax.numpy as jnp
from jax.experimental import pallas as pl
from jax.experimental.pallas import tpu as pltpu


def _stce_kernel(x_ref, t_ref, loss_ref, *, total_rows, row_tile):
    x = x_ref[...].astype(jnp.float32)   # (tm, C)
    t = t_ref[...].astype(jnp.float32)   # (tm, C)

    # Numerically stable log-softmax pieces along the class (lane) axis,
    # without materializing log_probs:
    #   -(t * (shifted - lse)).sum(-1) == lse * sum(t) - sum(t * shifted)
    m = jnp.max(x, axis=-1, keepdims=True)                             # (tm, 1)
    shifted = x - m                                                    # (tm, C)
    lse = jnp.log(jnp.sum(jnp.exp(shifted), axis=-1, keepdims=True))   # (tm, 1)
    s = jnp.sum(t * shifted, axis=-1, keepdims=True)                   # (tm, 1)
    ts = jnp.sum(t, axis=-1, keepdims=True)                            # (tm, 1)
    row_loss = lse * ts - s                                            # (tm, 1)

    # Mask rows past the logical end (the last tile may read garbage rows).
    row = jax.lax.broadcasted_iota(jnp.int32, row_loss.shape, 0)
    gid = pl.program_id(0) * row_tile + row
    loss_ref[...] = jnp.where(gid < total_rows, row_loss, 0.0)


def _sublane_mult(*dtypes):
    # Sublane tiling granularity: 8 for f32, 16 for bf16/f16, 32 for int8/fp8.
    g = 8
    for d in dtypes:
        g = max(g, 32 // jnp.dtype(d).itemsize)
    return g


def soft_target_cross_entropy(inputs, targets, *, target_block_bytes=4 * 1024 * 1024):
    """inputs, targets: same shape (..., C). Returns scalar f32 loss."""
    assert inputs.shape == targets.shape
    C = inputs.shape[-1]
    x = inputs.reshape(-1, C)
    t = targets.reshape(-1, C)
    N = x.shape[0]

    isx = jnp.dtype(x.dtype).itemsize
    ist = jnp.dtype(t.dtype).itemsize
    sub = _sublane_mult(x.dtype, t.dtype)

    # Row tile: biggest multiple of the sublane granularity giving ~target_block_bytes
    # per input block, clamped to the (padded) row count.
    # TODO(synk): for very large C (e.g. >=64K classes in f32) a single row slab
    # is already huge; a class-chunk grid axis with online-softmax accumulation
    # would be needed to keep blocks within VMEM.
    tm = max(sub, (target_block_bytes // (C * max(isx, ist))) // sub * sub)
    n_pad = pl.cdiv(N, sub) * sub
    tm = min(tm, n_pad)
    grid = (pl.cdiv(N, tm),)

    # Scoped VMEM: 2 inputs x 2 pipeline buffers + slack; explicit so large tiles
    # work on v5e (16 MiB default) / v6e (32 MiB) and stay bounded for v7x (64 MiB).
    input_vmem = 2 * tm * C * (isx + ist)
    vmem_limit = int(min(100 * 2**20, max(32 * 2**20, input_vmem + 8 * 2**20)))

    kernel = functools.partial(_stce_kernel, total_rows=N, row_tile=tm)

    row_losses = pl.pallas_call(
        kernel,
        out_shape=jax.ShapeDtypeStruct((N, 1), jnp.float32),
        grid_spec=pltpu.PrefetchScalarGridSpec(
            num_scalar_prefetch=0,
            grid=grid,
            in_specs=[
                pl.BlockSpec((tm, C), lambda i: (i, 0)),
                pl.BlockSpec((tm, C), lambda i: (i, 0)),
            ],
            out_specs=pl.BlockSpec((tm, 1), lambda i: (i, 0)),
        ),
        compiler_params=pltpu.CompilerParams(
            dimension_semantics=("parallel",),   # no carry -> megacore-shardable
            vmem_limit_bytes=vmem_limit,
        ),
    )(x, t)

    # Tiny wrapper-side reduction (N floats), keeps the grid axis parallel.
    return jnp.sum(row_losses) / jnp.float32(N)


def _reference(inputs, targets):
    lp = jax.nn.log_softmax(inputs.astype(jnp.float32), axis=-1)
    return -(targets.astype(jnp.float32) * lp).sum(axis=-1).mean()


if __name__ == "__main__":
    key = jax.random.PRNGKey(0)
    k1, k2, k3, k4 = jax.random.split(key, 4)

    # Small shapes: batch=2, seq=8, classes=32 -> 16 rows of 32 classes.
    B, S, C = 2, 8, 32
    logits = jax.random.normal(k1, (B, S, C), dtype=jnp.float32)
    targets = jax.nn.softmax(jax.random.normal(k2, (B, S, C), dtype=jnp.float32), axis=-1)

    loss = soft_target_cross_entropy(logits, targets)
    loss = jax.block_until_ready(loss)
    ref = _reference(logits, targets)
    assert jnp.allclose(loss, ref, rtol=1e-5, atol=1e-5), (loss, ref)

    # Ragged row-count case (N = 15, not a multiple of the sublane tile):
    # exercises the masked partial tile.
    logits2 = jax.random.normal(k3, (3, 5, 40), dtype=jnp.float32)
    targets2 = jax.nn.softmax(jax.random.normal(k4, (3, 5, 40), dtype=jnp.float32), axis=-1)
    loss2 = jax.block_until_ready(soft_target_cross_entropy(logits2, targets2))
    ref2 = _reference(logits2, targets2)
    assert jnp.allclose(loss2, ref2, rtol=1e-5, atol=1e-5), (loss2, ref2)

    print("KERNEL_OK")
</pallas_src>

<mosaic_0001>
module attributes {stable_mosaic.version = 11 : i64} {
  func.func @_stce_kernel(%arg0: i32, %arg1: memref<16x32xf32, #tpu.memory_space<vmem>>, %arg2: memref<16x32xf32, #tpu.memory_space<vmem>>, %arg3: memref<16x1xf32, #tpu.memory_space<vmem>>) attributes {dimension_semantics = [#tpu.dimension_semantics<parallel>], iteration_bounds = array<i64: 1>, scalar_prefetch = 0 : i64, scratch_operands = 0 : i64, tpu.core_type = #tpu.core_type<tc>, window_params = [{transform_indices = @transform_0, window_bounds = array<i64: 16, 32>}, {transform_indices = @transform_1, window_bounds = array<i64: 16, 32>}, {transform_indices = @transform_2, window_bounds = array<i64: 16, 1>}]} {
    %c0 = arith.constant 0 : index
    %c0_0 = arith.constant 0 : index
    %0 = vector.load %arg1[%c0, %c0_0] : memref<16x32xf32, #tpu.memory_space<vmem>>, vector<16x32xf32>
    %c0_1 = arith.constant 0 : index
    %c0_2 = arith.constant 0 : index
    %1 = vector.load %arg2[%c0_1, %c0_2] : memref<16x32xf32, #tpu.memory_space<vmem>>, vector<16x32xf32>
    %cst = arith.constant dense<0xFF800000> : vector<16xf32>
    %2 = vector.multi_reduction <maximumf>, %0, %cst [1] : vector<16x32xf32> to vector<16xf32>
    %3 = vector.shape_cast %2 : vector<16xf32> to vector<16x1xf32>
    %4 = vector.broadcast %3 : vector<16x1xf32> to vector<16x32xf32>
    %5 = arith.subf %0, %4 : vector<16x32xf32>
    %6 = math.exp %5 : vector<16x32xf32>
    %cst_3 = arith.constant dense<0.000000e+00> : vector<16xf32>
    %7 = vector.multi_reduction <add>, %6, %cst_3 [1] : vector<16x32xf32> to vector<16xf32>
    %8 = vector.shape_cast %7 : vector<16xf32> to vector<16x1xf32>
    %9 = math.log %8 : vector<16x1xf32>
    %10 = arith.mulf %1, %5 : vector<16x32xf32>
    %cst_4 = arith.constant dense<0.000000e+00> : vector<16xf32>
    %11 = vector.multi_reduction <add>, %10, %cst_4 [1] : vector<16x32xf32> to vector<16xf32>
    %12 = vector.shape_cast %11 : vector<16xf32> to vector<16x1xf32>
    %cst_5 = arith.constant dense<0.000000e+00> : vector<16xf32>
    %13 = vector.multi_reduction <add>, %1, %cst_5 [1] : vector<16x32xf32> to vector<16xf32>
    %14 = vector.shape_cast %13 : vector<16xf32> to vector<16x1xf32>
    %15 = arith.mulf %9, %14 : vector<16x1xf32>
    %16 = arith.subf %15, %12 : vector<16x1xf32>
    %17 = tpu.iota {dimensions = array<i32: 0>} : vector<16x1xi32>
    %c16_i32 = arith.constant 16 : i32
    %18 = arith.muli %arg0, %c16_i32 : i32
    %19 = vector.broadcast %18 : i32 to vector<16x1xi32>
    %20 = arith.addi %19, %17 : vector<16x1xi32>
    %c16_i32_6 = arith.constant 16 : i32
    %21 = vector.broadcast %c16_i32_6 : i32 to vector<16x1xi32>
    %22 = arith.cmpi slt, %20, %21 : vector<16x1xi32>
    %cst_7 = arith.constant 0.000000e+00 : f32
    %23 = vector.broadcast %cst_7 : f32 to vector<16x1xf32>
    %24 = arith.select %22, %16, %23 : vector<16x1xi1>, vector<16x1xf32>
    %c0_8 = arith.constant 0 : index
    %c0_9 = arith.constant 0 : index
    %25 = vector.load %arg3[%c0_8, %c0_9] : memref<16x1xf32, #tpu.memory_space<vmem>>, vector<16x1xf32>
    tpu.vector_store %arg3[%c0_8, %c0_9], %24 {strides = array<i32>} : memref<16x1xf32, #tpu.memory_space<vmem>>, vector<16x1xf32>,
    return
  }
  func.func @transform_0(%arg0: i32) -> (i32, i32) {
    %c0_i32 = arith.constant 0 : i32
    %c0_i32_0 = arith.constant 0 : i32
    return %arg0, %c0_i32 : i32, i32
  }
  func.func @transform_1(%arg0: i32) -> (i32, i32) {
    %c0_i32 = arith.constant 0 : i32
    %c0_i32_0 = arith.constant 0 : i32
    return %arg0, %c0_i32 : i32, i32
  }
  func.func @transform_2(%arg0: i32) -> (i32, i32) {
    %c0_i32 = arith.constant 0 : i32
    %c0_i32_0 = arith.constant 0 : i32
    return %arg0, %c0_i32 : i32, i32
  }
}

</mosaic_0001>

<llo_original>
// kernel: tpu_custom_call.1
$region0: #{tpu_custom_call.1}
  #allocation0 [shape = 'u32[]', space=smem, size = 0x4, offset = 0x4, fixed_abs, tag = 'smem constant byte address 0x4 - core index']
  #allocation1 [shape = 'u32[144,128]{1,0:T(1,128)}', space=vmem, size = 0x12000, scoped, tag = 'internal scratch']
  %s0 = inlined_call_operand.hbm [shape: f32[16,32], index: 0, kind: input, shape index: {}]
  %s1 = inlined_call_operand.hbm [shape: f32[16,32], index: 1, kind: input, shape index: {}]
  %s2 = inlined_call_operand.vmem [shape: f32[16,1], index: 2, kind: output, shape index: {}]
  %s3 = sld [smem:[#allocation0]]
  $region26: #{tpu_custom_call.1} parent=0
    _
  %s5 = ssub.s32 1, %s3
  %s6 = scalar_select 0, %s5, %s3
  $region1: #{tpu_custom_call.1} parent=0
    #allocation2 [shape = 'u8[8192]{0}', space=vmem, size = 0x2000, scoped, tag = 'input window, operand 0, single buffered']
    #allocation3 [shape = 's32[1]{0}', space=sflag, size = 0x4, scoped, tag = 'scoped memory for tpu_custom_call.1']
    #allocation4 [shape = 'u8[8192]{0}', space=vmem, size = 0x2000, scoped, tag = 'input window, operand 1, single buffered']
    #allocation5 [shape = 's32[1]{0}', space=sflag, size = 0x4, scoped, tag = 'scoped memory for tpu_custom_call.1']
    %7 = vsyncpa [#allocation3], 0
    %8 = vsyncpa [#allocation5], 0
    // Predicated region
    $region2: #{tpu_custom_call.1} parent=1 // pred_check
      _
    $region3: #{tpu_custom_call.1} parent=1 // pred_check_branch
      %10 = sbr.rel (0) target = $region5
    $region4: #{tpu_custom_call.1} parent=1 // pred_region
      %s12 = ssub.s32 256, 256
      %13 = vsyncadd [#allocation3], %s12
      %s14 = sshll.u32 [#allocation2], 4
      %s15 = int_to_ptr.vmem [resolvable:$true] %s14
      %20 = dma.hbm_to_vmem [thread:$0]  %s0, 256, %s15, [#allocation3], 128, 128, 8
    $region5: #{tpu_custom_call.1} parent=1 // pred_fallthru
      _
    // Predicated region
    $region6: #{tpu_custom_call.1} parent=1 // pred_check
      _
    $region7: #{tpu_custom_call.1} parent=1 // pred_check_branch
      %22 = sbr.rel (0) target = $region9
    $region8: #{tpu_custom_call.1} parent=1 // pred_region
      %s24 = ssub.s32 256, 256
      %25 = vsyncadd [#allocation5], %s24
      %s26 = sshll.u32 [#allocation4], 4
      %s27 = int_to_ptr.vmem [resolvable:$true] %s26
      %32 = dma.hbm_to_vmem [thread:$0]  %s1, 256, %s27, [#allocation5], 128, 128, 8
    $region9: #{tpu_custom_call.1} parent=1 // pred_fallthru
      _
    // Predicated region
    $region10: #{tpu_custom_call.1} parent=1 // pred_check
      _
    $region11: #{tpu_custom_call.1} parent=1 // pred_check_branch
      %34 = sbr.rel (0) target = $region13
    $region12: #{tpu_custom_call.1} parent=1 // pred_region
      %35 = dma.done [#allocation3], 256
    $region13: #{tpu_custom_call.1} parent=1 // pred_fallthru
      _
    // Predicated region
    $region14: #{tpu_custom_call.1} parent=1 // pred_check
      _
    $region15: #{tpu_custom_call.1} parent=1 // pred_check_branch
      %37 = sbr.rel (0) target = $region17
    $region16: #{tpu_custom_call.1} parent=1 // pred_region
      %38 = dma.done [#allocation5], 256
    $region17: #{tpu_custom_call.1} parent=1 // pred_fallthru
      _
    %v39 = vld [vmem:[#allocation2] sm:$0xff]
    %v40 = vld [vmem:[#allocation2 + $0x8] sm:$0xff]
    %v41 = vld [vmem:[#allocation4] sm:$0xff]
    %v42 = vld [vmem:[#allocation4 + $0x8] sm:$0xff]
    %vm43 = vcmask 261120
    %v44 = vsel %vm43, %v39, -inf
    %45 = vmax.xlane.f32.xlu0 %v44
    %v46 = vpop.xlane.xlu0 %45
    %v47 = vsel %vm43, %v40, -inf
    %48 = vmax.xlane.f32.xlu0 %v47
    %v49 = vpop.xlane.xlu0 %48
    %v50 = vsub.f32 %v39, %v46
    %v51 = vsub.f32 %v40, %v49
    %v52 = vmul.f32 %v50, 1.442695
    %v53 = vpow.pop %v52
    %v54 = vmul.f32 %v51, 1.442695
    %v55 = vpow.pop %v54
    %v56 = vsel %vm43, %v53, 0.0
    %57 = vadd.xlane.f32.xlu0 %v56
    %v58 = vpop.xlane.xlu0 %57
    %v59 = vsel %vm43, %v55, 0.0
    %60 = vadd.xlane.f32.xlu0 %v59
    %v61 = vpop.xlane.xlu0 %60
    %v62 = vlog2.pop %v58
    %v63 = vmul.f32 %v62, 0.6931472
    %v64 = vlog2.pop %v61
    %v65 = vmul.f32 %v64, 0.6931472
    %v66 = vmul.f32 %v41, %v50
    %v67 = vmul.f32 %v42, %v51
    %v68 = vsel %vm43, %v66, 0.0
    %69 = vadd.xlane.f32.xlu0 %v68
    %v70 = vpop.xlane.xlu0 %69
    %v71 = vsel %vm43, %v67, 0.0
    %72 = vadd.xlane.f32.xlu0 %v71
    %v73 = vpop.xlane.xlu0 %72
    %v74 = vsel %vm43, %v41, 0.0
    %75 = vadd.xlane.f32.xlu0 %v74
    %v76 = vpop.xlane.xlu0 %75
    %v77 = vsel %vm43, %v42, 0.0
    %78 = vadd.xlane.f32.xlu0 %v77
    %v79 = vpop.xlane.xlu0 %78
    %v80 = vmul.f32 %v63, %v76
    %v81 = vmul.f32 %v65, %v79
    %v82 = vsub.f32 %v80, %v70
    %v83 = vsub.f32 %v81, %v73
    %v84 = vlaneseq
    %v85 = vshrl.u32 %v84, 7
    %v86 = vadd.s32 %v85, 8
    %s87 = smul.u32 0, 16
    %v88 = vstv %s87
    %v89 = vadd.s32 %v88, %v85
    %v90 = vadd.s32 %v88, %v86
    %vm91 = vcmp.lt.s32.totalorder %v89, 16
    %vm92 = vcmp.lt.s32.totalorder %v90, 16
    %v93 = vsel %vm91, %v82, 0.0
    %v94 = vsel %vm92, %v83, 0.0
    %vm95 = vcmask 7168
    %96 = vst.msk [vmem:[%s2] sm:$0xff] %vm95, %v93
    %97 = vst.msk [vmem:[%s2 + $0x8] sm:$0xff] %vm95, %v94
    // Predicated region
    $region18: #{tpu_custom_call.1} parent=1 // pred_check
      _
    $region19: #{tpu_custom_call.1} parent=1 // pred_check_branch
      %99 = sbr.rel (0) target = $region21
    $region20: #{tpu_custom_call.1} parent=1 // pred_region
      _
    $region21: #{tpu_custom_call.1} parent=1 // pred_fallthru
      _
    // Predicated region
    $region22: #{tpu_custom_call.1} parent=1 // pred_check
      _
    $region23: #{tpu_custom_call.1} parent=1 // pred_check_branch
      %101 = sbr.rel (0) target = $region25
    $region24: #{tpu_custom_call.1} parent=1 // pred_region
      _
    $region25: #{tpu_custom_call.1} parent=1 // pred_fallthru
      _
    %102 = vsyncpa [#allocation3], 1
    %103 = vsyncpa [#allocation5], 1

</llo_original>
